<compile_context>
chip_gen: v7x
topology: tpu7x:2x2x1
jax: 0.10.0
libtpu: 0.0.40
codegen_flags: <defaults>
</compile_context>

<pallas_src>
import jax
import jax.numpy as jnp
from jax.experimental import pallas as pl
from jax.experimental.pallas import tpu as pltpu


def _round_up(n, m):
    return ((n + m - 1) // m) * m


def actor_kernel(x_ref, w1_ref, b1_ref, w2_ref, b2_ref, w3_ref, b3_ref, o_ref):
    # x tile and weights are bf16; all matmuls accumulate in f32 on the MXU,
    # element-wise math stays f32.
    x = x_ref[...]

    # linear1 + relu
    h = jnp.dot(x, w1_ref[...], preferred_element_type=jnp.float32) + b1_ref[...]
    h = jnp.maximum(h, 0.0)

    # linear2 + relu
    h = jnp.dot(h.astype(jnp.bfloat16), w2_ref[...],
                preferred_element_type=jnp.float32) + b2_ref[...]
    h = jnp.maximum(h, 0.0)

    # head: narrow (TM, 3) result — only the real columns are ever materialized
    y = jnp.dot(h.astype(jnp.bfloat16), w3_ref[...],
                preferred_element_type=jnp.float32) + b3_ref[...]

    # column 0 -> tanh (steer), columns 1,2 -> sigmoid (accel, brake)
    # single transcendental pass: tanh(x) = 2*sigmoid(2x) - 1
    col = jax.lax.broadcasted_iota(jnp.int32, y.shape, 1)
    is_steer = col == 0
    s = jax.nn.sigmoid(jnp.where(is_steer, 2.0 * y, y))
    out = jnp.where(is_steer, 2.0 * s - 1.0, s)

    o_ref[...] = out.astype(o_ref.dtype)


def actor_forward(x, params, *, block_rows=2048):
    """x: [B, input_size] float32. params: bf16 weights / f32 biases from
    prepare_params(). Returns [B, 3] float32."""
    w1, b1, w2, b2, w3, b3 = params
    B, in_size = x.shape
    hidden = w1.shape[1]
    out_size = w3.shape[1]

    # Batch tile: as big as possible (overhead/HBM-bound kernel), 16-row
    # aligned (bf16 sublane packing), and — when the batch can be split —
    # capped so the grid has >= 2 steps for v7x's two TensorCores.
    SUB = 16
    TM = _round_up(B, SUB)
    if B > SUB:
        TM = min(TM, _round_up(pl.cdiv(B, 2), SUB))
    TM = min(TM, block_rows)  # keep block_rows <= 8192 or set vmem_limit_bytes
    Bp = _round_up(B, TM)

    # bf16 matmul operands: halves the dominant x-tile DMA; accumulation f32.
    x = x.astype(jnp.bfloat16)
    if Bp != B:
        x = jnp.pad(x, ((0, Bp - B), (0, 0)))

    grid = (Bp // TM,)

    cost = pl.CostEstimate(
        flops=2 * Bp * (in_size * hidden + hidden * hidden + hidden * out_size),
        transcendentals=Bp * out_size,
        bytes_accessed=(
            2 * Bp * in_size                                                # x (bf16)
            + 2 * (in_size * hidden + hidden * hidden + hidden * out_size)  # W (bf16)
            + 4 * (2 * hidden + out_size)                                   # biases (f32)
            + 4 * Bp * out_size                                             # output (f32)
        ),
    )

    out = pl.pallas_call(
        actor_kernel,
        out_shape=jax.ShapeDtypeStruct((Bp, out_size), jnp.float32),
        grid=grid,
        in_specs=[
            pl.BlockSpec((TM, in_size), lambda i: (i, 0)),   # x tile, pipelined
            pl.BlockSpec(w1.shape, lambda i: (0, 0)),        # resident weights
            pl.BlockSpec(b1.shape, lambda i: (0, 0)),
            pl.BlockSpec(w2.shape, lambda i: (0, 0)),
            pl.BlockSpec(b2.shape, lambda i: (0, 0)),
            pl.BlockSpec(w3.shape, lambda i: (0, 0)),
            pl.BlockSpec(b3.shape, lambda i: (0, 0)),
        ],
        # Narrow store: last dim (3) equals the full array dim, so this is a
        # legal block; only the real columns hit HBM.
        out_specs=pl.BlockSpec((TM, out_size), lambda i: (i, 0)),
        compiler_params=pltpu.CompilerParams(
            dimension_semantics=("parallel",)),  # v7x: 2 TCs split the batch grid
        cost_estimate=cost,
    )(x, w1, b1, w2, b2, w3, b3)

    return out[:B] if Bp != B else out


def init_params(key, input_size, hidden_size, output_size):
    """Deterministic synthetic init (uniform, like nn.Linear's default range).
    Weights stored as [in, out] (f32 master copy)."""
    ks = jax.random.split(key, 6)

    def lin(kw, kb, fan_in, fan_out):
        bound = 1.0 / jnp.sqrt(fan_in)
        w = jax.random.uniform(kw, (fan_in, fan_out), jnp.float32, -bound, bound)
        b = jax.random.uniform(kb, (1, fan_out), jnp.float32, -bound, bound)
        return w, b

    w1, b1 = lin(ks[0], ks[1], input_size, hidden_size)
    w2, b2 = lin(ks[2], ks[3], hidden_size, hidden_size)
    w3, b3 = lin(ks[4], ks[5], hidden_size, output_size)
    return (w1, b1, w2, b2, w3, b3)


def prepare_params(params):
    """One-time conversion for the kernel (kept out of the per-call path):
    weights -> bf16, biases stay f32."""
    w1, b1, w2, b2, w3, b3 = params
    bf = jnp.bfloat16
    return (w1.astype(bf), b1, w2.astype(bf), b2, w3.astype(bf), b3)


def actor_reference(x, params):
    """Pure-JAX f32 reference matching the PyTorch module's forward."""
    w1, b1, w2, b2, w3, b3 = params
    h = jnp.maximum(x @ w1 + b1, 0.0)
    h = jnp.maximum(h @ w2 + b2, 0.0)
    y = h @ w3 + b3
    steer = jnp.tanh(y[:, 0:1])
    accel = jax.nn.sigmoid(y[:, 1:2])
    brake = jax.nn.sigmoid(y[:, 2:3])
    return jnp.concatenate([steer, accel, brake], axis=1)


if __name__ == "__main__":
    input_size, hidden_size, output_size = 32, 32, 3

    key = jax.random.PRNGKey(0)
    k_x, k_p, k_x2 = jax.random.split(key, 3)
    params_f32 = init_params(k_p, input_size, hidden_size, output_size)
    params_knl = prepare_params(params_f32)   # bf16 weights, converted once

    # Small batch (original spec scale): single grid step.
    batch = 8
    x = jax.random.normal(k_x, (batch, input_size), jnp.float32)
    out = jax.block_until_ready(actor_forward(x, params_knl))
    ref = actor_reference(x, params_f32)
    assert out.shape == (batch, output_size)
    # bf16 matmul operands -> slightly looser tolerance vs the f32 reference.
    assert jnp.allclose(out, ref, atol=3e-2, rtol=0), float(jnp.max(jnp.abs(out - ref)))

    # Larger, non-multiple batch exercises tiling + padding + >=2 grid steps.
    batch2 = 300
    x2 = jax.random.normal(k_x2, (batch2, input_size), jnp.float32)
    out2 = jax.block_until_ready(actor_forward(x2, params_knl))
    ref2 = actor_reference(x2, params_f32)
    assert out2.shape == (batch2, output_size)
    assert jnp.allclose(out2, ref2, atol=3e-2, rtol=0), float(jnp.max(jnp.abs(out2 - ref2)))

    print("KERNEL_OK")
</pallas_src>

<mosaic_0001>
module attributes {stable_mosaic.version = 11 : i64} {
  func.func @actor_kernel(%arg0: i32, %arg1: memref<16x32xbf16, #tpu.memory_space<vmem>>, %arg2: memref<32x32xbf16, #tpu.memory_space<vmem>>, %arg3: memref<1x32xf32, #tpu.memory_space<vmem>>, %arg4: memref<32x32xbf16, #tpu.memory_space<vmem>>, %arg5: memref<1x32xf32, #tpu.memory_space<vmem>>, %arg6: memref<32x3xbf16, #tpu.memory_space<vmem>>, %arg7: memref<1x3xf32, #tpu.memory_space<vmem>>, %arg8: memref<16x3xf32, #tpu.memory_space<vmem>>) attributes {dimension_semantics = [#tpu.dimension_semantics<parallel>], iteration_bounds = array<i64: 1>, scalar_prefetch = 0 : i64, scratch_operands = 0 : i64, tpu.core_type = #tpu.core_type<tc>, window_params = [{transform_indices = @transform_0, window_bounds = array<i64: 16, 32>}, {pipeline_mode = #tpu.pipeline_mode<synchronous>, transform_indices = @transform_1, window_bounds = array<i64: 32, 32>}, {pipeline_mode = #tpu.pipeline_mode<synchronous>, transform_indices = @transform_2, window_bounds = array<i64: 1, 32>}, {pipeline_mode = #tpu.pipeline_mode<synchronous>, transform_indices = @transform_3, window_bounds = array<i64: 32, 32>}, {pipeline_mode = #tpu.pipeline_mode<synchronous>, transform_indices = @transform_4, window_bounds = array<i64: 1, 32>}, {pipeline_mode = #tpu.pipeline_mode<synchronous>, transform_indices = @transform_5, window_bounds = array<i64: 32, 3>}, {pipeline_mode = #tpu.pipeline_mode<synchronous>, transform_indices = @transform_6, window_bounds = array<i64: 1, 3>}, {transform_indices = @transform_7, window_bounds = array<i64: 16, 3>}]} {
    %c0 = arith.constant 0 : index
    %c0_0 = arith.constant 0 : index
    %0 = vector.load %arg1[%c0, %c0_0] : memref<16x32xbf16, #tpu.memory_space<vmem>>, vector<16x32xbf16>
    %c0_1 = arith.constant 0 : index
    %c0_2 = arith.constant 0 : index
    %1 = vector.load %arg2[%c0_1, %c0_2] : memref<32x32xbf16, #tpu.memory_space<vmem>>, vector<32x32xbf16>
    %cst = arith.constant dense<0.000000e+00> : vector<16x32xf32>
    %2 = tpu.matmul %0, %1, %cst {dimension_numbers = #tpu.dot_dimension_numbers<[1], [0], [0], [1], [0, 0, 1, 1], [], []>} : vector<16x32xbf16>, vector<32x32xbf16>, vector<16x32xf32> -> vector<16x32xf32>
    %c0_3 = arith.constant 0 : index
    %c0_4 = arith.constant 0 : index
    %3 = vector.load %arg3[%c0_3, %c0_4] : memref<1x32xf32, #tpu.memory_space<vmem>>, vector<1x32xf32>
    %4 = vector.broadcast %3 : vector<1x32xf32> to vector<16x32xf32>
    %5 = arith.addf %2, %4 : vector<16x32xf32>
    %cst_5 = arith.constant 0.000000e+00 : f32
    %6 = vector.broadcast %cst_5 : f32 to vector<16x32xf32>
    %7 = arith.maximumf %5, %6 : vector<16x32xf32>
    %8 = arith.truncf %7 : vector<16x32xf32> to vector<16x32xbf16>
    %c0_6 = arith.constant 0 : index
    %c0_7 = arith.constant 0 : index
    %9 = vector.load %arg4[%c0_6, %c0_7] : memref<32x32xbf16, #tpu.memory_space<vmem>>, vector<32x32xbf16>
    %cst_8 = arith.constant dense<0.000000e+00> : vector<16x32xf32>
    %10 = tpu.matmul %8, %9, %cst_8 {dimension_numbers = #tpu.dot_dimension_numbers<[1], [0], [0], [1], [0, 0, 1, 1], [], []>} : vector<16x32xbf16>, vector<32x32xbf16>, vector<16x32xf32> -> vector<16x32xf32>
    %c0_9 = arith.constant 0 : index
    %c0_10 = arith.constant 0 : index
    %11 = vector.load %arg5[%c0_9, %c0_10] : memref<1x32xf32, #tpu.memory_space<vmem>>, vector<1x32xf32>
    %12 = vector.broadcast %11 : vector<1x32xf32> to vector<16x32xf32>
    %13 = arith.addf %10, %12 : vector<16x32xf32>
    %cst_11 = arith.constant 0.000000e+00 : f32
    %14 = vector.broadcast %cst_11 : f32 to vector<16x32xf32>
    %15 = arith.maximumf %13, %14 : vector<16x32xf32>
    %16 = arith.truncf %15 : vector<16x32xf32> to vector<16x32xbf16>
    %c0_12 = arith.constant 0 : index
    %c0_13 = arith.constant 0 : index
    %17 = vector.load %arg6[%c0_12, %c0_13] : memref<32x3xbf16, #tpu.memory_space<vmem>>, vector<32x3xbf16>
    %cst_14 = arith.constant dense<0.000000e+00> : vector<16x3xf32>
    %18 = tpu.matmul %16, %17, %cst_14 {dimension_numbers = #tpu.dot_dimension_numbers<[1], [0], [0], [1], [0, 0, 1, 1], [], []>} : vector<16x32xbf16>, vector<32x3xbf16>, vector<16x3xf32> -> vector<16x3xf32>
    %c0_15 = arith.constant 0 : index
    %c0_16 = arith.constant 0 : index
    %19 = vector.load %arg7[%c0_15, %c0_16] : memref<1x3xf32, #tpu.memory_space<vmem>>, vector<1x3xf32>
    %20 = vector.broadcast %19 : vector<1x3xf32> to vector<16x3xf32>
    %21 = arith.addf %18, %20 : vector<16x3xf32>
    %22 = tpu.iota {dimensions = array<i32: 1>} : vector<16x3xi32>
    %c0_i32 = arith.constant 0 : i32
    %23 = vector.broadcast %c0_i32 : i32 to vector<16x3xi32>
    %24 = arith.cmpi eq, %22, %23 : vector<16x3xi32>
    %cst_17 = arith.constant 2.000000e+00 : f32
    %25 = vector.broadcast %cst_17 : f32 to vector<16x3xf32>
    %26 = arith.mulf %25, %21 : vector<16x3xf32>
    %27 = arith.select %24, %26, %21 : vector<16x3xi1>, vector<16x3xf32>
    %28 = arith.negf %27 : vector<16x3xf32>
    %29 = math.exp %28 : vector<16x3xf32>
    %cst_18 = arith.constant 1.000000e+00 : f32
    %30 = vector.broadcast %cst_18 : f32 to vector<16x3xf32>
    %31 = arith.addf %30, %29 : vector<16x3xf32>
    %32 = arith.divf %30, %31 : vector<16x3xf32>
    %cst_19 = arith.constant 2.000000e+00 : f32
    %33 = vector.broadcast %cst_19 : f32 to vector<16x3xf32>
    %34 = arith.mulf %33, %32 : vector<16x3xf32>
    %cst_20 = arith.constant 1.000000e+00 : f32
    %35 = vector.broadcast %cst_20 : f32 to vector<16x3xf32>
    %36 = arith.subf %34, %35 : vector<16x3xf32>
    %37 = arith.select %24, %36, %32 : vector<16x3xi1>, vector<16x3xf32>
    %c0_21 = arith.constant 0 : index
    %c0_22 = arith.constant 0 : index
    %38 = vector.load %arg8[%c0_21, %c0_22] : memref<16x3xf32, #tpu.memory_space<vmem>>, vector<16x3xf32>
    tpu.vector_store %arg8[%c0_21, %c0_22], %37 {strides = array<i32>} : memref<16x3xf32, #tpu.memory_space<vmem>>, vector<16x3xf32>,
    return
  }
  func.func @transform_0(%arg0: i32) -> (i32, i32) {
    %c0_i32 = arith.constant 0 : i32
    %c0_i32_0 = arith.constant 0 : i32
    return %arg0, %c0_i32 : i32, i32
  }
  func.func @transform_1(%arg0: i32) -> (i32, i32) {
    %c0_i32 = arith.constant 0 : i32
    %c0_i32_0 = arith.constant 0 : i32
    %c0_i32_1 = arith.constant 0 : i32
    return %c0_i32, %c0_i32_0 : i32, i32
  }
  func.func @transform_2(%arg0: i32) -> (i32, i32) {
    %c0_i32 = arith.constant 0 : i32
    %c0_i32_0 = arith.constant 0 : i32
    %c0_i32_1 = arith.constant 0 : i32
    return %c0_i32, %c0_i32_0 : i32, i32
  }
  func.func @transform_3(%arg0: i32) -> (i32, i32) {
    %c0_i32 = arith.constant 0 : i32
    %c0_i32_0 = arith.constant 0 : i32
    %c0_i32_1 = arith.constant 0 : i32
    return %c0_i32, %c0_i32_0 : i32, i32
  }
  func.func @transform_4(%arg0: i32) -> (i32, i32) {
    %c0_i32 = arith.constant 0 : i32
    %c0_i32_0 = arith.constant 0 : i32
    %c0_i32_1 = arith.constant 0 : i32
    return %c0_i32, %c0_i32_0 : i32, i32
  }
  func.func @transform_5(%arg0: i32) -> (i32, i32) {
    %c0_i32 = arith.constant 0 : i32
    %c0_i32_0 = arith.constant 0 : i32
    %c0_i32_1 = arith.constant 0 : i32
    return %c0_i32, %c0_i32_0 : i32, i32
  }
  func.func @transform_6(%arg0: i32) -> (i32, i32) {
    %c0_i32 = arith.constant 0 : i32
    %c0_i32_0 = arith.constant 0 : i32
    %c0_i32_1 = arith.constant 0 : i32
    return %c0_i32, %c0_i32_0 : i32, i32
  }
  func.func @transform_7(%arg0: i32) -> (i32, i32) {
    %c0_i32 = arith.constant 0 : i32
    %c0_i32_0 = arith.constant 0 : i32
    return %arg0, %c0_i32 : i32, i32
  }
}

</mosaic_0001>

<llo_original>
// kernel: tpu_custom_call.1
$region0: #{tpu_custom_call.1}
  #allocation0 [shape = 'u32[]', space=smem, size = 0x4, offset = 0x4, fixed_abs, tag = 'smem constant byte address 0x4 - core index']
  #allocation1 [shape = 'u32[144,128]{1,0:T(1,128)}', space=vmem, size = 0x12000, scoped, tag = 'internal scratch']
  %s0 = inlined_call_operand.hbm [shape: bf16[16,32], index: 0, kind: input, shape index: {}]
  %s1 = inlined_call_operand.vmem [shape: bf16[32,32], index: 1, kind: input, shape index: {}]
  %s2 = inlined_call_operand.vmem [shape: f32[1,32], index: 2, kind: input, shape index: {}]
  %s3 = inlined_call_operand.hbm [shape: bf16[32,32], index: 3, kind: input, shape index: {}]
  %s4 = inlined_call_operand.vmem [shape: f32[1,32], index: 4, kind: input, shape index: {}]
  %s5 = inlined_call_operand.vmem [shape: bf16[32,3], index: 5, kind: input, shape index: {}]
  %s6 = inlined_call_operand.vmem [shape: f32[1,3], index: 6, kind: input, shape index: {}]
  %s7 = inlined_call_operand.vmem [shape: f32[16,3], index: 7, kind: output, shape index: {}]
  %s8 = sld [smem:[#allocation0]]
  $region46: #{tpu_custom_call.1} parent=0
    _
  %s10 = ssub.s32 1, %s8
  %s11 = scalar_select 0, %s10, %s8
  $region1: #{tpu_custom_call.1} parent=0
    #allocation2 [shape = 'u8[4096]{0}', space=vmem, size = 0x1000, scoped, tag = 'input window, operand 0, single buffered']
    #allocation3 [shape = 's32[1]{0}', space=sflag, size = 0x4, scoped, tag = 'scoped memory for tpu_custom_call.1']
    #allocation4 [shape = 'u8[8192]{0}', space=vmem, size = 0x2000, scoped, tag = 'input window, operand 3, single buffered']
    #allocation5 [shape = 's32[1]{0}', space=sflag, size = 0x4, scoped, tag = 'scoped memory for tpu_custom_call.1']
    %12 = vsyncpa [#allocation3], 0
    %13 = vsyncpa [#allocation5], 0
    // Predicated region
    $region2: #{tpu_custom_call.1} parent=1 // pred_check
      _
    $region3: #{tpu_custom_call.1} parent=1 // pred_check_branch
      %15 = sbr.rel (0) target = $region5
    $region4: #{tpu_custom_call.1} parent=1 // pred_region
      %s17 = ssub.s32 128, 128
      %18 = vsyncadd [#allocation3], %s17
      %s19 = sshll.u32 [#allocation2], 4
      %s20 = int_to_ptr.vmem [resolvable:$true] %s19
      %25 = dma.hbm_to_vmem [thread:$0]  %s0, 128, %s20, [#allocation3], 64, 64, 4
    $region5: #{tpu_custom_call.1} parent=1 // pred_fallthru
      _
    // Predicated region
    $region6: #{tpu_custom_call.1} parent=1 // pred_check
      _
    $region7: #{tpu_custom_call.1} parent=1 // pred_check_branch
      %27 = sbr.rel (0) target = $region9
    $region8: #{tpu_custom_call.1} parent=1 // pred_region
      _
    $region9: #{tpu_custom_call.1} parent=1 // pred_fallthru
      _
    // Predicated region
    $region10: #{tpu_custom_call.1} parent=1 // pred_check
      _
    $region11: #{tpu_custom_call.1} parent=1 // pred_check_branch
      %29 = sbr.rel (0) target = $region13
    $region12: #{tpu_custom_call.1} parent=1 // pred_region
      _
    $region13: #{tpu_custom_call.1} parent=1 // pred_fallthru
      _
    // Predicated region
    $region14: #{tpu_custom_call.1} parent=1 // pred_check
      _
    $region15: #{tpu_custom_call.1} parent=1 // pred_check_branch
      %31 = sbr.rel (0) target = $region17
    $region16: #{tpu_custom_call.1} parent=1 // pred_region
      %s33 = ssub.s32 256, 256
      %34 = vsyncadd [#allocation5], %s33
      %s35 = sshll.u32 [#allocation4], 4
      %s36 = int_to_ptr.vmem [resolvable:$true] %s35
      %41 = dma.hbm_to_vmem [thread:$0]  %s3, 256, %s36, [#allocation5], 64, 64, 4
    $region17: #{tpu_custom_call.1} parent=1 // pred_fallthru
      _
    // Predicated region
    $region18: #{tpu_custom_call.1} parent=1 // pred_check
      _
    $region19: #{tpu_custom_call.1} parent=1 // pred_check_branch
      %43 = sbr.rel (0) target = $region21
    $region20: #{tpu_custom_call.1} parent=1 // pred_region
      _
    $region21: #{tpu_custom_call.1} parent=1 // pred_fallthru
      _
    // Predicated region
    $region22: #{tpu_custom_call.1} parent=1 // pred_check
      _
    $region23: #{tpu_custom_call.1} parent=1 // pred_check_branch
      %45 = sbr.rel (0) target = $region25
    $region24: #{tpu_custom_call.1} parent=1 // pred_region
      _
    $region25: #{tpu_custom_call.1} parent=1 // pred_fallthru
      _
    // Predicated region
    $region26: #{tpu_custom_call.1} parent=1 // pred_check
      _
    $region27: #{tpu_custom_call.1} parent=1 // pred_check_branch
      %47 = sbr.rel (0) target = $region29
    $region28: #{tpu_custom_call.1} parent=1 // pred_region
      _
    $region29: #{tpu_custom_call.1} parent=1 // pred_fallthru
      _
    // Predicated region
    $region30: #{tpu_custom_call.1} parent=1 // pred_check
      _
    $region31: #{tpu_custom_call.1} parent=1 // pred_check_branch
      %49 = sbr.rel (0) target = $region33
    $region32: #{tpu_custom_call.1} parent=1 // pred_region
      %50 = dma.done [#allocation3], 128
    $region33: #{tpu_custom_call.1} parent=1 // pred_fallthru
      _
    // Predicated region
    $region34: #{tpu_custom_call.1} parent=1 // pred_check
      _
    $region35: #{tpu_custom_call.1} parent=1 // pred_check_branch
      %52 = sbr.rel (0) target = $region37
    $region36: #{tpu_custom_call.1} parent=1 // pred_region
      %53 = dma.done [#allocation5], 256
    $region37: #{tpu_custom_call.1} parent=1 // pred_fallthru
      _
    %v55 = vld [vmem:[#allocation2] sm:$0xf]
    %v56 = vld [vmem:[#allocation2 + $0x4] sm:$0xf]
    %v57 = vld [vmem:[%s1] sm:$0xf]
    %v58 = vld [vmem:[%s1 + $0x4] sm:$0xf]
    %v59 = vld [vmem:[%s1 + $0x8] sm:$0xf]
    %v60 = vld [vmem:[%s1 + $0xc] sm:$0xf]
    %v61 = vld [vmem:[%s2] sm:$0x1]
    %v63 = vlaneseq
    %v64 = vshrl.u32 %v63, 7
    %v65 = vsub.s32 0, %v64
    %v66 = vrot.slane %v61, %v65
    %v70 = vunpack.c.l.b16 %v55
    %v71 = vunpack.c.l.b16 %v56
    %v72 = vpack.c.b16 %v71, %v70
    %v77 = vunpack.c.l.b16 %v57
    %v78 = vunpack.c.l.b16 %v58
    %v79 = vunpack.c.l.b16 %v59
    %v80 = vunpack.c.l.b16 %v60
    %v81 = vpack.c.b16 %v78, %v77
    %v82 = vpack.c.b16 %v80, %v79
    %vm85 = vcmask 261120
    %v87 = vsel %vm85, %v72, 0
    %89 = vmatprep.subr.bf16.mxu0 0
    %90 = vmatpush1.bf16.msra.mxu0 %v81
    %91 = vmatprep.subr.bf16.mxu0 0
    %92 = vmatpush1.bf16.msra.mxu0 %v82
    %93 = vmatprep.subr.bf16.mxu0 0
    %94 = vmatpush1.bf16.msra.mxu0 0
    %95 = vmatprep.subr.bf16.mxu0 0
    %96 = vmatpush1.bf16.msra.mxu0 0
    %97 = vmatprep.subr.bf16.mxu0 0
    %98 = vmatpush1.bf16.msra.mxu0 0
    %99 = vmatprep.subr.bf16.mxu0 0
    %100 = vmatpush1.bf16.msra.mxu0 0
    %101 = vmatprep.subr.bf16.mxu0 0
    %102 = vmatpush1.bf16.msra.mxu0 0
    %103 = vmatprep.subr.bf16.mxu0 0
    %104 = vmatpush1.bf16.msra.mxu0 0
    %105 = vmatprep.subr.bf16.mxu0 0
    %106 = vmatpush1.bf16.msra.mxu0 0
    %107 = vmatprep.subr.bf16.mxu0 0
    %108 = vmatpush1.bf16.msra.mxu0 0
    %109 = vmatprep.subr.bf16.mxu0 0
    %110 = vmatpush1.bf16.msra.mxu0 0
    %111 = vmatprep.subr.bf16.mxu0 0
    %112 = vmatpush1.bf16.msra.mxu0 0
    %113 = vmatprep.subr.bf16.mxu0 0
    %114 = vmatpush1.bf16.msra.mxu0 0
    %115 = vmatprep.subr.bf16.mxu0 0
    %116 = vmatpush1.bf16.msra.mxu0 0
    %117 = vmatprep.subr.bf16.mxu0 0
    %118 = vmatpush1.bf16.msra.mxu0 0
    %119 = vmatprep.subr.bf16.mxu0 0
    %120 = vmatpush1.bf16.msra.mxu0 0
    %121 = vmatprep.mubr.bf16.mxu0 0
    %122 = vmatmul.mubr.bf16.gmra.mrb[0].mxu0 %v87
    %v123 = vpop.f32.mrb[0].mxu0
    %v124 = vadd.f32 %v66, %v123
    %v125 = vpop.f32.mrb[0].mxu0
    %v126 = vpop.f32.mrb[0].mxu0
    %v127 = vadd.f32 %v66, %v126
    %v128 = vpop.f32.mrb[0].mxu0
    %129 = vdwg.mxu0
    %v130 = vmax.f32 %v124, 0.0
    %v131 = vmax.f32 %v127, 0.0
    %v132 = vpack.c.bf16 %v131, %v130
    %v133 = vld [vmem:[#allocation4] sm:$0xf]
    %v134 = vld [vmem:[#allocation4 + $0x4] sm:$0xf]
    %v135 = vld [vmem:[#allocation4 + $0x8] sm:$0xf]
    %v136 = vld [vmem:[#allocation4 + $0xc] sm:$0xf]
    %v137 = vld [vmem:[%s4] sm:$0x1]
    %v139 = vlaneseq
    %v140 = vshrl.u32 %v139, 7
    %v141 = vsub.s32 0, %v140
    %v142 = vrot.slane %v137, %v141
    %v148 = vunpack.c.l.b16 %v133
    %v149 = vunpack.c.l.b16 %v134
    %v150 = vunpack.c.l.b16 %v135
    %v151 = vunpack.c.l.b16 %v136
    %v152 = vpack.c.b16 %v149, %v148
    %v153 = vpack.c.b16 %v151, %v150
    %v157 = vsel %vm85, %v132, 0
    %159 = vmatprep.subr.bf16.mxu0 0
    %160 = vmatpush1.bf16.msra.mxu0 %v152
    %161 = vmatprep.subr.bf16.mxu0 0
    %162 = vmatpush1.bf16.msra.mxu0 %v153
    %163 = vmatprep.subr.bf16.mxu0 0
    %164 = vmatpush1.bf16.msra.mxu0 0
    %165 = vmatprep.subr.bf16.mxu0 0
    %166 = vmatpush1.bf16.msra.mxu0 0
    %167 = vmatprep.subr.bf16.mxu0 0
    %168 = vmatpush1.bf16.msra.mxu0 0
    %169 = vmatprep.subr.bf16.mxu0 0
    %170 = vmatpush1.bf16.msra.mxu0 0
    %171 = vmatprep.subr.bf16.mxu0 0
    %172 = vmatpush1.bf16.msra.mxu0 0
    %173 = vmatprep.subr.bf16.mxu0 0
    %174 = vmatpush1.bf16.msra.mxu0 0
    %175 = vmatprep.subr.bf16.mxu0 0
    %176 = vmatpush1.bf16.msra.mxu0 0
    %177 = vmatprep.subr.bf16.mxu0 0
    %178 = vmatpush1.bf16.msra.mxu0 0
    %179 = vmatprep.subr.bf16.mxu0 0
    %180 = vmatpush1.bf16.msra.mxu0 0
    %181 = vmatprep.subr.bf16.mxu0 0
    %182 = vmatpush1.bf16.msra.mxu0 0
    %183 = vmatprep.subr.bf16.mxu0 0
    %184 = vmatpush1.bf16.msra.mxu0 0
    %185 = vmatprep.subr.bf16.mxu0 0
    %186 = vmatpush1.bf16.msra.mxu0 0
    %187 = vmatprep.subr.bf16.mxu0 0
    %188 = vmatpush1.bf16.msra.mxu0 0
    %189 = vmatprep.subr.bf16.mxu0 0
    %190 = vmatpush1.bf16.msra.mxu0 0
    %191 = vmatprep.mubr.bf16.mxu0 0
    %192 = vmatmul.mubr.bf16.gmra.mrb[0].mxu0 %v157
    %v193 = vpop.f32.mrb[0].mxu0
    %v194 = vadd.f32 %v142, %v193
    %v195 = vpop.f32.mrb[0].mxu0
    %v196 = vpop.f32.mrb[0].mxu0
    %v197 = vadd.f32 %v142, %v196
    %v198 = vpop.f32.mrb[0].mxu0
    %199 = vdwg.mxu0
    %v200 = vmax.f32 %v194, 0.0
    %v201 = vmax.f32 %v197, 0.0
    %v202 = vpack.c.bf16 %v201, %v200
    %v203 = vld [vmem:[%s5] sm:$0xf]
    %v204 = vld [vmem:[%s5 + $0x4] sm:$0xf]
    %v205 = vld [vmem:[%s5 + $0x8] sm:$0xf]
    %v206 = vld [vmem:[%s5 + $0xc] sm:$0xf]
    %v207 = vld [vmem:[%s6] sm:$0x1]
    %v209 = vlaneseq
    %v210 = vshrl.u32 %v209, 7
    %v211 = vsub.s32 0, %v210
    %v212 = vrot.slane %v207, %v211
    %v218 = vunpack.c.l.b16 %v203
    %v219 = vunpack.c.l.b16 %v204
    %v220 = vunpack.c.l.b16 %v205
    %v221 = vunpack.c.l.b16 %v206
    %v222 = vpack.c.b16 %v219, %v218
    %v223 = vpack.c.b16 %v221, %v220
    %v227 = vsel %vm85, %v202, 0
    %229 = vmatprep.subr.bf16.mxu0 0
    %230 = vmatpush1.bf16.msra.mxu0 %v222
    %231 = vmatprep.subr.bf16.mxu0 0
    %232 = vmatpush1.bf16.msra.mxu0 %v223
    %233 = vmatprep.subr.bf16.mxu0 0
    %234 = vmatpush1.bf16.msra.mxu0 0
    %235 = vmatprep.subr.bf16.mxu0 0
    %236 = vmatpush1.bf16.msra.mxu0 0
    %237 = vmatprep.subr.bf16.mxu0 0
    %238 = vmatpush1.bf16.msra.mxu0 0
    %239 = vmatprep.subr.bf16.mxu0 0
    %240 = vmatpush1.bf16.msra.mxu0 0
    %241 = vmatprep.subr.bf16.mxu0 0
    %242 = vmatpush1.bf16.msra.mxu0 0
    %243 = vmatprep.subr.bf16.mxu0 0
    %244 = vmatpush1.bf16.msra.mxu0 0
    %245 = vmatprep.subr.bf16.mxu0 0
    %246 = vmatpush1.bf16.msra.mxu0 0
    %247 = vmatprep.subr.bf16.mxu0 0
    %248 = vmatpush1.bf16.msra.mxu0 0
    %249 = vmatprep.subr.bf16.mxu0 0
    %250 = vmatpush1.bf16.msra.mxu0 0
    %251 = vmatprep.subr.bf16.mxu0 0
    %252 = vmatpush1.bf16.msra.mxu0 0
    %253 = vmatprep.subr.bf16.mxu0 0
    %254 = vmatpush1.bf16.msra.mxu0 0
    %255 = vmatprep.subr.bf16.mxu0 0
    %256 = vmatpush1.bf16.msra.mxu0 0
    %257 = vmatprep.subr.bf16.mxu0 0
    %258 = vmatpush1.bf16.msra.mxu0 0
    %259 = vmatprep.subr.bf16.mxu0 0
    %260 = vmatpush1.bf16.msra.mxu0 0
    %261 = vmatprep.mubr.bf16.mxu0 0
    %262 = vmatmul.mubr.bf16.gmra.mrb[0].mxu0 %v227
    %v263 = vpop.f32.mrb[0].mxu0
    %v264 = vadd.f32 %v212, %v263
    %v265 = vpop.f32.mrb[0].mxu0
    %v266 = vpop.f32.mrb[0].mxu0
    %v267 = vadd.f32 %v212, %v266
    %v268 = vpop.f32.mrb[0].mxu0
    %269 = vdwg.mxu0
    %v270 = vlaneseq
    %v271 = vand.u32 %v270, 127
    %vm272 = vcmp.eq.s32.totalorder %v271, 0
    %v273 = vmul.f32 %v264, 2.0
    %v274 = vmul.f32 %v267, 2.0
    %v275 = vsel %vm272, %v273, %v264
    %v276 = vsel %vm272, %v274, %v267
    %v277 = vxor.u32 %v275, 2147483648
    %v278 = vxor.u32 %v276, 2147483648
    %v279 = vmul.f32 %v277, 1.442695
    %v280 = vpow.pop %v279
    %v281 = vmul.f32 %v278, 1.442695
    %v282 = vpow.pop %v281
    %v283 = vadd.f32 %v280, 1.0
    %v284 = vadd.f32 %v282, 1.0
    %v285 = vrcp.pop %v283
    %v286 = vmul.f32 1.0, %v285
    %v287 = vrcp.pop %v284
    %v288 = vmul.f32 1.0, %v287
    %v289 = vmul.f32 %v286, 2.0
    %v290 = vmul.f32 %v288, 2.0
    %v291 = vsub.f32 %v289, 1.0
    %v292 = vsub.f32 %v290, 1.0
    %v293 = vsel %vm272, %v291, %v286
    %v294 = vsel %vm272, %v292, %v288
    %vm295 = vcmask 23552
    %296 = vst.msk [vmem:[%s7] sm:$0xff] %vm295, %v293
    %297 = vst.msk [vmem:[%s7 + $0x8] sm:$0xff] %vm295, %v294
    // Predicated region
    $region38: #{tpu_custom_call.1} parent=1 // pred_check
      _
    $region39: #{tpu_custom_call.1} parent=1 // pred_check_branch
      %299 = sbr.rel (0) target = $region41
    $region40: #{tpu_custom_call.1} parent=1 // pred_region
      _
    $region41: #{tpu_custom_call.1} parent=1 // pred_fallthru
      _
    // Predicated region
    $region42: #{tpu_custom_call.1} parent=1 // pred_check
      _
    $region43: #{tpu_custom_call.1} parent=1 // pred_check_branch
      %301 = sbr.rel (0) target = $region45
    $region44: #{tpu_custom_call.1} parent=1 // pred_region
      _
    $region45: #{tpu_custom_call.1} parent=1 // pred_fallthru
      _
    %302 = vsyncpa [#allocation3], 1
    %303 = vsyncpa [#allocation5], 1

</llo_original>
